<compile_context>
chip_gen: v7x
topology: tpu7x:2x2x1
jax: 0.10.0
libtpu: 0.0.40
codegen_flags: <defaults>
</compile_context>

<pallas_src>
import math
from typing import NamedTuple

import jax
import jax.numpy as jnp
from jax.experimental import pallas as pl
from jax.experimental.pallas import tpu as pltpu


def _round_up(n, m):
    return ((n + m - 1) // m) * m


def _pad_gate_cols(a, H, Hp):
    """Pad each of the 4 contiguous gate chunks along the last axis H -> Hp."""
    if Hp == H:
        return a
    lead = a.shape[0]
    a = a.reshape(lead, 4, H)
    a = jnp.pad(a, ((0, 0), (0, 0), (0, Hp - H)))
    return a.reshape(lead, 4 * Hp)


def _interleave_gates(a, Hp, tn):
    """Reorder columns from gate-contiguous [i|f|g|o] (each Hp wide) to
    hidden-tile-contiguous: each 4*tn block holds [i_j|f_j|g_j|o_j]."""
    lead = a.shape[0]
    n_tiles = Hp // tn
    a = a.reshape(lead, 4, n_tiles, tn)
    a = jnp.transpose(a, (0, 2, 1, 3))
    return a.reshape(lead, 4 * Hp)


class LSTMParams(NamedTuple):
    wx: jax.Array          # (Ip, 4*Hp) gate-interleaved, compute dtype (bf16)
    wh: jax.Array          # (Hp, 4*Hp) gate-interleaved, compute dtype (bf16)
    b: jax.Array           # (1, 4*Hp)  gate-interleaved, f32 (folded b_xh+b_hh)
    input_size: int
    hidden_size: int
    tn: int                # hidden tile width (multiple of 128, divides Hp)


def prepare_lstm_params(w_xh, b_xh, w_hh, b_hh, *, compute_dtype=jnp.bfloat16,
                        tn=None):
    """One-time weight prep, hoisted out of the per-step hot path (and out of
    any sequence scan): fold biases, 128-pad gates, gate-interleave, cast."""
    I = w_xh.shape[0]
    H = w_hh.shape[0]
    assert w_xh.shape[1] == 4 * H and w_hh.shape[1] == 4 * H

    Ip = _round_up(I, 128)
    Hp = _round_up(H, 128)
    if tn is None:
        tn = next(t for t in (512, 256, 128) if Hp % t == 0)
    assert Hp % tn == 0 and tn % 128 == 0

    def prep_w(w, rows_pad):
        w = _pad_gate_cols(w, H, Hp)                      # zero-padded gates
        w = _interleave_gates(w, Hp, tn)
        w = jnp.pad(w, ((0, rows_pad - w.shape[0]), (0, 0)))
        return w.astype(compute_dtype)

    wx = prep_w(w_xh, Ip)                                 # (Ip, 4*Hp)
    wh = prep_w(w_hh, Hp)                                 # (Hp, 4*Hp)
    b = _interleave_gates(_pad_gate_cols(b_xh + b_hh, H, Hp), Hp, tn)
    b = b.astype(jnp.float32)                             # (1, 4*Hp)
    return LSTMParams(wx=wx, wh=wh, b=b, input_size=I, hidden_size=H, tn=tn)


def lstm_cell_kernel(x_ref, h_ref, c_ref, wx_ref, wh_ref, b_ref,
                     h_out_ref, c_out_ref):
    """One (hidden-tile, batch-tile) block of the LSTM cell."""
    TN = c_ref.shape[1]

    # Two bf16 MXU matmuls accumulated in f32 (no xh concat materialized).
    g = jnp.dot(x_ref[...], wx_ref[...], preferred_element_type=jnp.float32)
    g = g + jnp.dot(h_ref[...], wh_ref[...], preferred_element_type=jnp.float32)
    g = g + b_ref[...]                                    # (BM, 4*TN) f32

    # sigmoid(z) = 0.5 * (tanh(0.5 * z) + 1): one EUP op instead of exp+recip.
    def sig(z):
        return 0.5 * (jnp.tanh(0.5 * z) + 1.0)

    inputgate = sig(g[:, 0 * TN:1 * TN])
    forgetgate = sig(g[:, 1 * TN:2 * TN])
    cellgate = jnp.tanh(g[:, 2 * TN:3 * TN])
    outputgate = sig(g[:, 3 * TN:4 * TN])

    c_new = forgetgate * c_ref[...].astype(jnp.float32) + inputgate * cellgate
    h_new = outputgate * jnp.tanh(c_new)

    h_out_ref[...] = h_new.astype(h_out_ref.dtype)
    c_out_ref[...] = c_new.astype(c_out_ref.dtype)


def lstm_cell_forward(x, h, c, params: LSTMParams, *, block_b=None):
    """Forward of LSTMCell: returns (h_, c_).

    x: (B, I); h, c: (B, H); params from prepare_lstm_params (pre-fused/padded).
    """
    B, I = x.shape
    H = params.hidden_size
    assert I == params.input_size and h.shape == (B, H) and c.shape == (B, H)
    dtype = x.dtype
    cdt = params.wx.dtype

    Ip = params.wx.shape[0]
    Hp = params.wh.shape[0]
    TN = params.tn
    nN = Hp // TN

    # Batch tile: multiple of 8 (sublane constraint); 256 fills the 256-wide
    # MXU on v6e/v7x.  (On v5e, pass block_b=128 if the store slot saturates.)
    if block_b is None:
        block_b = 256 if B >= 256 else 128
    BM = min(block_b, _round_up(B, 8))
    BM = max(8, (BM // 8) * 8)
    Bp = _round_up(B, BM)
    nB = Bp // BM

    # Cheap per-step activation prep (bf16 cast + zero pad); weights untouched.
    xp = jnp.pad(x.astype(cdt), ((0, Bp - B), (0, Ip - I)))
    hp = jnp.pad(h.astype(cdt), ((0, Bp - B), (0, Hp - H)))
    cp = jnp.pad(c, ((0, Bp - B), (0, Hp - H)))

    # Generation-aware VMEM limit: ~96 MiB on 128 MiB parts, 48 MiB on v7x.
    try:
        vmem_cap = pltpu.get_tpu_info().vmem_capacity_bytes
    except Exception:
        vmem_cap = 64 << 20
    vmem_limit = int(max(48 << 20, min((vmem_cap * 3) // 4, 112 << 20)))

    # Single-buffer the weights/bias when their index_map is constant over the
    # whole grid (one hidden tile) -- halves the dominant VMEM allocation.
    weight_spec_kwargs = {"pipeline_mode": pl.Buffered(1)} if nN == 1 else {}

    w_bytes = params.wx.dtype.itemsize
    a_bytes = xp.dtype.itemsize
    s_bytes = dtype.itemsize
    cost = pl.CostEstimate(
        flops=2 * Bp * (Ip + Hp) * 4 * Hp + 10 * Bp * Hp,
        transcendentals=5 * Bp * Hp,
        bytes_accessed=(nN * Bp * (Ip + Hp) * a_bytes
                        + (Ip + Hp) * 4 * Hp * w_bytes
                        + 4 * Hp * 4
                        + Bp * Hp * s_bytes
                        + 2 * Bp * Hp * s_bytes),
    )

    # Grid: hidden tiles (slow) x batch tiles (fast). Weight blocks stay
    # resident across the inner batch loop; both axes are parallel so the
    # hidden axis can be split across v7x's two TensorCores.
    grid = (nN, nB)

    # TODO(synk): if this cell is driven inside a sequence scan, add a trailing
    # "arbitrary" time grid axis (or emit_pipeline over T) with W/b at constant
    # index_map and h/c carried in VMEM scratch, so W streams once per sequence.
    h_pad, c_pad = pl.pallas_call(
        lstm_cell_kernel,
        out_shape=(
            jax.ShapeDtypeStruct((Bp, Hp), dtype),       # h_
            jax.ShapeDtypeStruct((Bp, Hp), dtype),       # c_
        ),
        grid=grid,
        in_specs=[
            pl.BlockSpec((BM, Ip), lambda j, i: (i, 0)),     # x batch tile
            pl.BlockSpec((BM, Hp), lambda j, i: (i, 0)),     # h batch tile
            pl.BlockSpec((BM, TN), lambda j, i: (i, j)),     # c tile
            pl.BlockSpec((Ip, 4 * TN), lambda j, i: (0, j), **weight_spec_kwargs),
            pl.BlockSpec((Hp, 4 * TN), lambda j, i: (0, j), **weight_spec_kwargs),
            pl.BlockSpec((1, 4 * TN), lambda j, i: (0, j), **weight_spec_kwargs),
        ],
        out_specs=(
            pl.BlockSpec((BM, TN), lambda j, i: (i, j)),
            pl.BlockSpec((BM, TN), lambda j, i: (i, j)),
        ),
        compiler_params=pltpu.CompilerParams(
            dimension_semantics=("parallel", "parallel"),
            vmem_limit_bytes=vmem_limit,
        ),
        cost_estimate=cost,
    )(xp, hp, cp, params.wx, params.wh, params.b)

    return h_pad[:B, :H], c_pad[:B, :H]


def init_lstm_params(key, input_size, hidden_size, dtype=jnp.float32):
    """Mirror RNNCellBase.reset_parameters + LSTMCell.reset_parameters
    (uniform +-1/sqrt(H); forget-gate biases set to 1/H)."""
    std = 1.0 / math.sqrt(hidden_size)
    k1, k2, k3, k4 = jax.random.split(key, 4)
    # Stored as (in, 4H) == transpose of PyTorch's (4H, in) Linear weight.
    w_xh = jax.random.uniform(k1, (input_size, 4 * hidden_size), dtype,
                              minval=-std, maxval=std)
    w_hh = jax.random.uniform(k2, (hidden_size, 4 * hidden_size), dtype,
                              minval=-std, maxval=std)
    b_xh = jax.random.uniform(k3, (1, 4 * hidden_size), dtype,
                              minval=-std, maxval=std)
    b_hh = jax.random.uniform(k4, (1, 4 * hidden_size), dtype,
                              minval=-std, maxval=std)
    incr = 1.0 / hidden_size
    b_xh = b_xh.at[:, hidden_size:2 * hidden_size].set(incr)
    b_hh = b_hh.at[:, hidden_size:2 * hidden_size].set(incr)
    return w_xh, b_xh, w_hh, b_hh


if __name__ == "__main__":
    batch = 8
    input_size = 16
    hidden_size = 32
    dtype = jnp.float32

    key = jax.random.PRNGKey(0)
    k_param, k_x = jax.random.split(key, 2)

    w_xh, b_xh, w_hh, b_hh = init_lstm_params(k_param, input_size, hidden_size, dtype)
    params = prepare_lstm_params(w_xh, b_xh, w_hh, b_hh)   # one-time weight prep

    x = jax.random.normal(k_x, (batch, input_size), dtype)
    # hc=None path in the module -> zero-initialized hidden / cell state.
    h0 = jnp.zeros((batch, hidden_size), dtype)
    c0 = jnp.zeros((batch, hidden_size), dtype)

    h_out, c_out = lstm_cell_forward(x, h0, c0, params)
    jax.block_until_ready((h_out, c_out))

    # Pure-JAX f32 reference of the original module math (standard sigmoid).
    g = x @ w_xh + b_xh + h0 @ w_hh + b_hh
    H = hidden_size
    i_ = jax.nn.sigmoid(g[:, :H]);       f_ = jax.nn.sigmoid(g[:, H:2 * H])
    g_ = jnp.tanh(g[:, 2 * H:3 * H]);    o_ = jax.nn.sigmoid(g[:, 3 * H:])
    c_ref = f_ * c0 + i_ * g_
    h_ref = o_ * jnp.tanh(c_ref)
    assert h_out.shape == (batch, hidden_size) and c_out.shape == (batch, hidden_size)
    # bf16 matmul path -> loosened tolerance vs the f32 reference.
    assert jnp.allclose(h_out, h_ref, atol=2e-2, rtol=2e-2), "h mismatch"
    assert jnp.allclose(c_out, c_ref, atol=2e-2, rtol=2e-2), "c mismatch"

    print("KERNEL_OK")
</pallas_src>

<mosaic_0001>
module attributes {stable_mosaic.version = 11 : i64} {
  func.func @lstm_cell_kernel(%arg0: i32, %arg1: i32, %arg2: memref<8x128xbf16, #tpu.memory_space<vmem>>, %arg3: memref<8x128xbf16, #tpu.memory_space<vmem>>, %arg4: memref<8x128xf32, #tpu.memory_space<vmem>>, %arg5: memref<128x512xbf16, #tpu.memory_space<vmem>>, %arg6: memref<128x512xbf16, #tpu.memory_space<vmem>>, %arg7: memref<1x512xf32, #tpu.memory_space<vmem>>, %arg8: memref<8x128xf32, #tpu.memory_space<vmem>>, %arg9: memref<8x128xf32, #tpu.memory_space<vmem>>) attributes {dimension_semantics = [#tpu.dimension_semantics<parallel>, #tpu.dimension_semantics<parallel>], iteration_bounds = array<i64: 1, 1>, scalar_prefetch = 0 : i64, scratch_operands = 0 : i64, tpu.core_type = #tpu.core_type<tc>, window_params = [{transform_indices = @transform_0, window_bounds = array<i64: 8, 128>}, {transform_indices = @transform_1, window_bounds = array<i64: 8, 128>}, {transform_indices = @transform_2, window_bounds = array<i64: 8, 128>}, {pipeline_mode = #tpu.pipeline_mode<synchronous>, transform_indices = @transform_3, window_bounds = array<i64: 128, 512>}, {pipeline_mode = #tpu.pipeline_mode<synchronous>, transform_indices = @transform_4, window_bounds = array<i64: 128, 512>}, {pipeline_mode = #tpu.pipeline_mode<synchronous>, transform_indices = @transform_5, window_bounds = array<i64: 1, 512>}, {transform_indices = @transform_6, window_bounds = array<i64: 8, 128>}, {transform_indices = @transform_7, window_bounds = array<i64: 8, 128>}]} {
    %c0 = arith.constant 0 : index
    %c0_0 = arith.constant 0 : index
    %0 = vector.load %arg2[%c0, %c0_0] : memref<8x128xbf16, #tpu.memory_space<vmem>>, vector<8x128xbf16>
    %c0_1 = arith.constant 0 : index
    %c0_2 = arith.constant 0 : index
    %1 = vector.load %arg5[%c0_1, %c0_2] : memref<128x512xbf16, #tpu.memory_space<vmem>>, vector<128x512xbf16>
    %cst = arith.constant dense<0.000000e+00> : vector<8x512xf32>
    %2 = tpu.matmul %0, %1, %cst {dimension_numbers = #tpu.dot_dimension_numbers<[1], [0], [0], [1], [0, 0, 1, 1], [], []>} : vector<8x128xbf16>, vector<128x512xbf16>, vector<8x512xf32> -> vector<8x512xf32>
    %c0_3 = arith.constant 0 : index
    %c0_4 = arith.constant 0 : index
    %3 = vector.load %arg3[%c0_3, %c0_4] : memref<8x128xbf16, #tpu.memory_space<vmem>>, vector<8x128xbf16>
    %c0_5 = arith.constant 0 : index
    %c0_6 = arith.constant 0 : index
    %4 = vector.load %arg6[%c0_5, %c0_6] : memref<128x512xbf16, #tpu.memory_space<vmem>>, vector<128x512xbf16>
    %cst_7 = arith.constant dense<0.000000e+00> : vector<8x512xf32>
    %5 = tpu.matmul %3, %4, %cst_7 {dimension_numbers = #tpu.dot_dimension_numbers<[1], [0], [0], [1], [0, 0, 1, 1], [], []>} : vector<8x128xbf16>, vector<128x512xbf16>, vector<8x512xf32> -> vector<8x512xf32>
    %6 = arith.addf %2, %5 : vector<8x512xf32>
    %c0_8 = arith.constant 0 : index
    %c0_9 = arith.constant 0 : index
    %7 = vector.load %arg7[%c0_8, %c0_9] : memref<1x512xf32, #tpu.memory_space<vmem>>, vector<1x512xf32>
    %8 = vector.broadcast %7 : vector<1x512xf32> to vector<8x512xf32>
    %9 = arith.addf %6, %8 : vector<8x512xf32>
    %10 = vector.extract_strided_slice %9 {offsets = [0, 0], sizes = [8, 128], strides = [1, 1]} : vector<8x512xf32> to vector<8x128xf32>
    %cst_10 = arith.constant 5.000000e-01 : f32
    %11 = vector.broadcast %cst_10 : f32 to vector<8x128xf32>
    %12 = arith.mulf %11, %10 : vector<8x128xf32>
    %13 = math.tanh %12 : vector<8x128xf32>
    %cst_11 = arith.constant 1.000000e+00 : f32
    %14 = vector.broadcast %cst_11 : f32 to vector<8x128xf32>
    %15 = arith.addf %13, %14 : vector<8x128xf32>
    %cst_12 = arith.constant 5.000000e-01 : f32
    %16 = vector.broadcast %cst_12 : f32 to vector<8x128xf32>
    %17 = arith.mulf %16, %15 : vector<8x128xf32>
    %18 = vector.extract_strided_slice %9 {offsets = [0, 128], sizes = [8, 128], strides = [1, 1]} : vector<8x512xf32> to vector<8x128xf32>
    %cst_13 = arith.constant 5.000000e-01 : f32
    %19 = vector.broadcast %cst_13 : f32 to vector<8x128xf32>
    %20 = arith.mulf %19, %18 : vector<8x128xf32>
    %21 = math.tanh %20 : vector<8x128xf32>
    %cst_14 = arith.constant 1.000000e+00 : f32
    %22 = vector.broadcast %cst_14 : f32 to vector<8x128xf32>
    %23 = arith.addf %21, %22 : vector<8x128xf32>
    %cst_15 = arith.constant 5.000000e-01 : f32
    %24 = vector.broadcast %cst_15 : f32 to vector<8x128xf32>
    %25 = arith.mulf %24, %23 : vector<8x128xf32>
    %26 = vector.extract_strided_slice %9 {offsets = [0, 256], sizes = [8, 128], strides = [1, 1]} : vector<8x512xf32> to vector<8x128xf32>
    %27 = math.tanh %26 : vector<8x128xf32>
    %28 = vector.extract_strided_slice %9 {offsets = [0, 384], sizes = [8, 128], strides = [1, 1]} : vector<8x512xf32> to vector<8x128xf32>
    %cst_16 = arith.constant 5.000000e-01 : f32
    %29 = vector.broadcast %cst_16 : f32 to vector<8x128xf32>
    %30 = arith.mulf %29, %28 : vector<8x128xf32>
    %31 = math.tanh %30 : vector<8x128xf32>
    %cst_17 = arith.constant 1.000000e+00 : f32
    %32 = vector.broadcast %cst_17 : f32 to vector<8x128xf32>
    %33 = arith.addf %31, %32 : vector<8x128xf32>
    %cst_18 = arith.constant 5.000000e-01 : f32
    %34 = vector.broadcast %cst_18 : f32 to vector<8x128xf32>
    %35 = arith.mulf %34, %33 : vector<8x128xf32>
    %c0_19 = arith.constant 0 : index
    %c0_20 = arith.constant 0 : index
    %36 = vector.load %arg4[%c0_19, %c0_20] : memref<8x128xf32, #tpu.memory_space<vmem>>, vector<8x128xf32>
    %37 = arith.mulf %25, %36 : vector<8x128xf32>
    %38 = arith.mulf %17, %27 : vector<8x128xf32>
    %39 = arith.addf %37, %38 : vector<8x128xf32>
    %40 = math.tanh %39 : vector<8x128xf32>
    %41 = arith.mulf %35, %40 : vector<8x128xf32>
    %c0_21 = arith.constant 0 : index
    %c0_22 = arith.constant 0 : index
    %42 = vector.load %arg8[%c0_21, %c0_22] : memref<8x128xf32, #tpu.memory_space<vmem>>, vector<8x128xf32>
    tpu.vector_store %arg8[%c0_21, %c0_22], %41 {strides = array<i32>} : memref<8x128xf32, #tpu.memory_space<vmem>>, vector<8x128xf32>,
    %c0_23 = arith.constant 0 : index
    %c0_24 = arith.constant 0 : index
    %43 = vector.load %arg9[%c0_23, %c0_24] : memref<8x128xf32, #tpu.memory_space<vmem>>, vector<8x128xf32>
    tpu.vector_store %arg9[%c0_23, %c0_24], %39 {strides = array<i32>} : memref<8x128xf32, #tpu.memory_space<vmem>>, vector<8x128xf32>,
    return
  }
  func.func @transform_0(%arg0: i32, %arg1: i32) -> (i32, i32) {
    %c0_i32 = arith.constant 0 : i32
    %c0_i32_0 = arith.constant 0 : i32
    return %arg1, %c0_i32 : i32, i32
  }
  func.func @transform_1(%arg0: i32, %arg1: i32) -> (i32, i32) {
    %c0_i32 = arith.constant 0 : i32
    %c0_i32_0 = arith.constant 0 : i32
    return %arg1, %c0_i32 : i32, i32
  }
  func.func @transform_2(%arg0: i32, %arg1: i32) -> (i32, i32) {
    %c0_i32 = arith.constant 0 : i32
    return %arg1, %arg0 : i32, i32
  }
  func.func @transform_3(%arg0: i32, %arg1: i32) -> (i32, i32) {
    %c0_i32 = arith.constant 0 : i32
    %c0_i32_0 = arith.constant 0 : i32
    return %c0_i32, %arg0 : i32, i32
  }
  func.func @transform_4(%arg0: i32, %arg1: i32) -> (i32, i32) {
    %c0_i32 = arith.constant 0 : i32
    %c0_i32_0 = arith.constant 0 : i32
    return %c0_i32, %arg0 : i32, i32
  }
  func.func @transform_5(%arg0: i32, %arg1: i32) -> (i32, i32) {
    %c0_i32 = arith.constant 0 : i32
    %c0_i32_0 = arith.constant 0 : i32
    return %c0_i32, %arg0 : i32, i32
  }
  func.func @transform_6(%arg0: i32, %arg1: i32) -> (i32, i32) {
    %c0_i32 = arith.constant 0 : i32
    return %arg1, %arg0 : i32, i32
  }
  func.func @transform_7(%arg0: i32, %arg1: i32) -> (i32, i32) {
    %c0_i32 = arith.constant 0 : i32
    return %arg1, %arg0 : i32, i32
  }
}

</mosaic_0001>

<llo_original>
// kernel: tpu_custom_call.1
$region0: #{tpu_custom_call.1}
  #allocation0 [shape = 'u32[]', space=smem, size = 0x4, offset = 0x4, fixed_abs, tag = 'smem constant byte address 0x4 - core index']
  #allocation1 [shape = 'u32[144,128]{1,0:T(1,128)}', space=vmem, size = 0x12000, scoped, tag = 'internal scratch']
  %s0 = inlined_call_operand.hbm [shape: bf16[8,128], index: 0, kind: input, shape index: {}]
  %s1 = inlined_call_operand.hbm [shape: bf16[8,128], index: 1, kind: input, shape index: {}]
  %s2 = inlined_call_operand.hbm [shape: f32[8,128], index: 2, kind: input, shape index: {}]
  %s3 = inlined_call_operand.hbm [shape: bf16[128,512], index: 3, kind: input, shape index: {}]
  %s4 = inlined_call_operand.hbm [shape: bf16[128,512], index: 4, kind: input, shape index: {}]
  %s5 = inlined_call_operand.vmem [shape: f32[1,512], index: 5, kind: input, shape index: {}]
  %s6 = inlined_call_operand.hbm [shape: f32[8,128], index: 6, kind: output, shape index: {0}]
  %s7 = inlined_call_operand.hbm [shape: f32[8,128], index: 7, kind: output, shape index: {1}]
  %8 = xla_tuple %s6, %s7
  %s9 = sld [smem:[#allocation0]]
  $region62: #{tpu_custom_call.1} parent=0
    _
  %s11 = ssub.s32 1, %s9
  %s12 = scalar_select 0, %s11, %s9
  $region1: #{tpu_custom_call.1} parent=0
    #allocation2 [shape = 'u8[2048]{0}', space=vmem, size = 0x800, scoped, tag = 'input window, operand 0, single buffered']
    #allocation3 [shape = 's32[1]{0}', space=sflag, size = 0x4, scoped, tag = 'scoped memory for tpu_custom_call.1']
    #allocation4 [shape = 's32[1]{0}', space=sflag, size = 0x4, scoped, tag = 'scoped memory for tpu_custom_call.1']
    #allocation5 [shape = 'u8[2048]{0}', space=vmem, size = 0x800, scoped, tag = 'input window, operand 1, single buffered']
    #allocation6 [shape = 's32[1]{0}', space=sflag, size = 0x4, scoped, tag = 'scoped memory for tpu_custom_call.1']
    #allocation7 [shape = 'u8[4096]{0}', space=vmem, size = 0x1000, scoped, tag = 'input window, operand 2, single buffered']
    #allocation8 [shape = 'u8[131072]{0}', space=vmem, size = 0x20000, scoped, tag = 'input window, operand 3, single buffered']
    #allocation9 [shape = 's32[1]{0}', space=sflag, size = 0x4, scoped, tag = 'scoped memory for tpu_custom_call.1']
    #allocation10 [shape = 'u8[131072]{0}', space=vmem, size = 0x20000, scoped, tag = 'input window, operand 4, single buffered']
    #allocation11 [shape = 'u8[4096]{0}', space=vmem, size = 0x1000, scoped, tag = 'output window, operand 0, single buffered']
    #allocation12 [shape = 'u8[4096]{0}', space=vmem, size = 0x1000, scoped, tag = 'output window, operand 1, single buffered']
    #allocation13 [shape = 's32[1]{0}', space=sflag, size = 0x4, scoped, tag = 'scoped memory for tpu_custom_call.1']
    %13 = vsyncpa [#allocation3], 0
    %14 = vsyncpa [#allocation6], 0
    %15 = vsyncpa [#allocation9], 0
    %16 = vsyncpa [#allocation4], 0
    %17 = vsyncpa [#allocation13], 0
    // Predicated region
    $region2: #{tpu_custom_call.1} parent=1 // pred_check
      _
    $region3: #{tpu_custom_call.1} parent=1 // pred_check_branch
      %19 = sbr.rel (0) target = $region5
    $region4: #{tpu_custom_call.1} parent=1 // pred_region
      %s21 = ssub.s32 64, 64
      %22 = vsyncadd [#allocation3], %s21
      %s24 = sshll.u32 [#allocation2], 4
      %s25 = int_to_ptr.vmem [resolvable:$true] %s24
      %27 = dma.hbm_to_vmem [thread:$0]  %s0, 64, %s25, [#allocation3]
    $region5: #{tpu_custom_call.1} parent=1 // pred_fallthru
      _
    // Predicated region
    $region6: #{tpu_custom_call.1} parent=1 // pred_check
      _
    $region7: #{tpu_custom_call.1} parent=1 // pred_check_branch
      %29 = sbr.rel (0) target = $region9
    $region8: #{tpu_custom_call.1} parent=1 // pred_region
      %s31 = ssub.s32 64, 64
      %32 = vsyncadd [#allocation6], %s31
      %s34 = sshll.u32 [#allocation5], 4
      %s35 = int_to_ptr.vmem [resolvable:$true] %s34
      %37 = dma.hbm_to_vmem [thread:$0]  %s1, 64, %s35, [#allocation6]
    $region9: #{tpu_custom_call.1} parent=1 // pred_fallthru
      _
    // Predicated region
    $region10: #{tpu_custom_call.1} parent=1 // pred_check
      _
    $region11: #{tpu_custom_call.1} parent=1 // pred_check_branch
      %39 = sbr.rel (0) target = $region13
    $region12: #{tpu_custom_call.1} parent=1 // pred_region
      %s41 = ssub.s32 128, 128
      %42 = vsyncadd [#allocation6], %s41
      %s44 = sshll.u32 [#allocation7], 4
      %s45 = int_to_ptr.vmem [resolvable:$true] %s44
      %47 = dma.hbm_to_vmem [thread:$0]  %s2, 128, %s45, [#allocation6]
    $region13: #{tpu_custom_call.1} parent=1 // pred_fallthru
      _
    // Predicated region
    $region14: #{tpu_custom_call.1} parent=1 // pred_check
      _
    $region15: #{tpu_custom_call.1} parent=1 // pred_check_branch
      %49 = sbr.rel (0) target = $region17
    $region16: #{tpu_custom_call.1} parent=1 // pred_region
      %s51 = ssub.s32 4096, 4096
      %52 = vsyncadd [#allocation9], %s51
      %s53 = sshll.u32 [#allocation8], 4
      %s54 = int_to_ptr.vmem [resolvable:$true] %s53
      %59 = dma.hbm_to_vmem [thread:$0]  %s3, 4096, %s54, [#allocation9], 256, 256, 16
    $region17: #{tpu_custom_call.1} parent=1 // pred_fallthru
      _
    // Predicated region
    $region18: #{tpu_custom_call.1} parent=1 // pred_check
      _
    $region19: #{tpu_custom_call.1} parent=1 // pred_check_branch
      %61 = sbr.rel (0) target = $region21
    $region20: #{tpu_custom_call.1} parent=1 // pred_region
      %s63 = ssub.s32 4096, 4096
      %64 = vsyncadd [#allocation9], %s63
      %s65 = sshll.u32 [#allocation10], 4
      %s66 = int_to_ptr.vmem [resolvable:$true] %s65
      %71 = dma.hbm_to_vmem [thread:$0]  %s4, 4096, %s66, [#allocation9], 256, 256, 16
    $region21: #{tpu_custom_call.1} parent=1 // pred_fallthru
      _
    // Predicated region
    $region22: #{tpu_custom_call.1} parent=1 // pred_check
      _
    $region23: #{tpu_custom_call.1} parent=1 // pred_check_branch
      %73 = sbr.rel (0) target = $region25
    $region24: #{tpu_custom_call.1} parent=1 // pred_region
      _
    $region25: #{tpu_custom_call.1} parent=1 // pred_fallthru
      _
    // Predicated region
    $region26: #{tpu_custom_call.1} parent=1 // pred_check
      _
    $region27: #{tpu_custom_call.1} parent=1 // pred_check_branch
      %75 = sbr.rel (0) target = $region29
    $region28: #{tpu_custom_call.1} parent=1 // pred_region
      %76 = dma.done [#allocation3], 64
    $region29: #{tpu_custom_call.1} parent=1 // pred_fallthru
      _
    // Predicated region
    $region30: #{tpu_custom_call.1} parent=1 // pred_check
      _
    $region31: #{tpu_custom_call.1} parent=1 // pred_check_branch
      %78 = sbr.rel (0) target = $region33
    $region32: #{tpu_custom_call.1} parent=1 // pred_region
      %79 = dma.done [#allocation6], 64
    $region33: #{tpu_custom_call.1} parent=1 // pred_fallthru
      _
    // Predicated region
    $region34: #{tpu_custom_call.1} parent=1 // pred_check
      _
    $region35: #{tpu_custom_call.1} parent=1 // pred_check_branch
      %81 = sbr.rel (0) target = $region37
    $region36: #{tpu_custom_call.1} parent=1 // pred_region
      %82 = dma.done [#allocation6], 128
    $region37: #{tpu_custom_call.1} parent=1 // pred_fallthru
      _
    // Predicated region
    $region38: #{tpu_custom_call.1} parent=1 // pred_check
      _
    $region39: #{tpu_custom_call.1} parent=1 // pred_check_branch
      %84 = sbr.rel (0) target = $region41
    $region40: #{tpu_custom_call.1} parent=1 // pred_region
      %85 = dma.done [#allocation9], 4096
    $region41: #{tpu_custom_call.1} parent=1 // pred_fallthru
      _
    // Predicated region
    $region42: #{tpu_custom_call.1} parent=1 // pred_check
      _
    $region43: #{tpu_custom_call.1} parent=1 // pred_check_branch
      %87 = sbr.rel (0) target = $region45
    $region44: #{tpu_custom_call.1} parent=1 // pred_region
      %88 = dma.done [#allocation9], 4096
    $region45: #{tpu_custom_call.1} parent=1 // pred_fallthru
      _
    %v90 = vld [vmem:[#allocation2] sm:$0xf]
    %v91 = vld [vmem:[#allocation8] sm:$0xff]
    %v92 = vld [vmem:[#allocation8 + $0x8] sm:$0xff]
    %v93 = vld [vmem:[#allocation8 + $0x10] sm:$0xff]
    %v94 = vld [vmem:[#allocation8 + $0x18] sm:$0xff]
    %v95 = vld [vmem:[#allocation8 + $0x20] sm:$0xff]
    %v96 = vld [vmem:[#allocation8 + $0x28] sm:$0xff]
    %v97 = vld [vmem:[#allocation8 + $0x30] sm:$0xff]
    %v98 = vld [vmem:[#allocation8 + $0x38] sm:$0xff]
    %v99 = vld [vmem:[#allocation8 + $0x40] sm:$0xff]
    %v100 = vld [vmem:[#allocation8 + $0x48] sm:$0xff]
    %v101 = vld [vmem:[#allocation8 + $0x50] sm:$0xff]
    %v102 = vld [vmem:[#allocation8 + $0x58] sm:$0xff]
    %v103 = vld [vmem:[#allocation8 + $0x60] sm:$0xff]
    %v104 = vld [vmem:[#allocation8 + $0x68] sm:$0xff]
    %v105 = vld [vmem:[#allocation8 + $0x70] sm:$0xff]
    %v106 = vld [vmem:[#allocation8 + $0x78] sm:$0xff]
    %v107 = vld [vmem:[#allocation8 + $0x80] sm:$0xff]
    %v108 = vld [vmem:[#allocation8 + $0x88] sm:$0xff]
    %v109 = vld [vmem:[#allocation8 + $0x90] sm:$0xff]
    %v110 = vld [vmem:[#allocation8 + $0x98] sm:$0xff]
    %v111 = vld [vmem:[#allocation8 + $0xa0] sm:$0xff]
    %v112 = vld [vmem:[#allocation8 + $0xa8] sm:$0xff]
    %v113 = vld [vmem:[#allocation8 + $0xb0] sm:$0xff]
    %v114 = vld [vmem:[#allocation8 + $0xb8] sm:$0xff]
    %v115 = vld [vmem:[#allocation8 + $0xc0] sm:$0xff]
    %v116 = vld [vmem:[#allocation8 + $0xc8] sm:$0xff]
    %v117 = vld [vmem:[#allocation8 + $0xd0] sm:$0xff]
    %v118 = vld [vmem:[#allocation8 + $0xd8] sm:$0xff]
    %v119 = vld [vmem:[#allocation8 + $0xe0] sm:$0xff]
    %v120 = vld [vmem:[#allocation8 + $0xe8] sm:$0xff]
    %v121 = vld [vmem:[#allocation8 + $0xf0] sm:$0xff]
    %v122 = vld [vmem:[#allocation8 + $0xf8] sm:$0xff]
    %v123 = vld [vmem:[#allocation5] sm:$0xf]
    %v124 = vld [vmem:[#allocation10] sm:$0xff]
    %v125 = vld [vmem:[#allocation10 + $0x8] sm:$0xff]
    %v126 = vld [vmem:[#allocation10 + $0x10] sm:$0xff]
    %v127 = vld [vmem:[#allocation10 + $0x18] sm:$0xff]
    %v128 = vld [vmem:[#allocation10 + $0x20] sm:$0xff]
    %v129 = vld [vmem:[#allocation10 + $0x28] sm:$0xff]
    %v130 = vld [vmem:[#allocation10 + $0x30] sm:$0xff]
    %v131 = vld [vmem:[#allocation10 + $0x38] sm:$0xff]
    %v132 = vld [vmem:[#allocation10 + $0x40] sm:$0xff]
    %v133 = vld [vmem:[#allocation10 + $0x48] sm:$0xff]
    %v134 = vld [vmem:[#allocation10 + $0x50] sm:$0xff]
    %v135 = vld [vmem:[#allocation10 + $0x58] sm:$0xff]
    %v136 = vld [vmem:[#allocation10 + $0x60] sm:$0xff]
    %v137 = vld [vmem:[#allocation10 + $0x68] sm:$0xff]
    %v138 = vld [vmem:[#allocation10 + $0x70] sm:$0xff]
    %v139 = vld [vmem:[#allocation10 + $0x78] sm:$0xff]
    %v140 = vld [vmem:[#allocation10 + $0x80] sm:$0xff]
    %v141 = vld [vmem:[#allocation10 + $0x88] sm:$0xff]
    %v142 = vld [vmem:[#allocation10 + $0x90] sm:$0xff]
    %v143 = vld [vmem:[#allocation10 + $0x98] sm:$0xff]
    %v144 = vld [vmem:[#allocation10 + $0xa0] sm:$0xff]
    %v145 = vld [vmem:[#allocation10 + $0xa8] sm:$0xff]
    %v146 = vld [vmem:[#allocation10 + $0xb0] sm:$0xff]
    %v147 = vld [vmem:[#allocation10 + $0xb8] sm:$0xff]
    %v148 = vld [vmem:[#allocation10 + $0xc0] sm:$0xff]
    %v149 = vld [vmem:[#allocation10 + $0xc8] sm:$0xff]
    %v150 = vld [vmem:[#allocation10 + $0xd0] sm:$0xff]
    %v151 = vld [vmem:[#allocation10 + $0xd8] sm:$0xff]
    %v152 = vld [vmem:[#allocation10 + $0xe0] sm:$0xff]
    %v153 = vld [vmem:[#allocation10 + $0xe8] sm:$0xff]
    %v154 = vld [vmem:[#allocation10 + $0xf0] sm:$0xff]
    %v155 = vld [vmem:[#allocation10 + $0xf8] sm:$0xff]
    %v188 = vunpack.c.l.b16 %v124
    %v189 = vunpack.c.h.b16 %v124
    %v190 = vunpack.c.l.b16 %v125
    %v191 = vunpack.c.h.b16 %v125
    %v192 = vunpack.c.l.b16 %v126
    %v193 = vunpack.c.h.b16 %v126
    %v194 = vunpack.c.l.b16 %v127
    %v195 = vunpack.c.h.b16 %v127
    %v196 = vunpack.c.l.b16 %v128
    %v197 = vunpack.c.h.b16 %v128
    %v198 = vunpack.c.l.b16 %v129
    %v199 = vunpack.c.h.b16 %v129
    %v200 = vunpack.c.l.b16 %v130
    %v201 = vunpack.c.h.b16 %v130
    %v202 = vunpack.c.l.b16 %v131
    %v203 = vunpack.c.h.b16 %v131
    %v204 = vunpack.c.l.b16 %v132
    %v205 = vunpack.c.h.b16 %v132
    %v206 = vunpack.c.l.b16 %v133
    %v207 = vunpack.c.h.b16 %v133
    %v208 = vunpack.c.l.b16 %v134
    %v209 = vunpack.c.h.b16 %v134
    %v210 = vunpack.c.l.b16 %v135
    %v211 = vunpack.c.h.b16 %v135
    %v212 = vunpack.c.l.b16 %v136
    %v213 = vunpack.c.h.b16 %v136
    %v214 = vunpack.c.l.b16 %v137
    %v215 = vunpack.c.h.b16 %v137
    %v216 = vunpack.c.l.b16 %v138
    %v217 = vunpack.c.h.b16 %v138
    %v218 = vunpack.c.l.b16 %v139
    %v219 = vunpack.c.h.b16 %v139
    %v220 = vunpack.c.l.b16 %v140
    %v221 = vunpack.c.h.b16 %v140
    %v222 = vunpack.c.l.b16 %v141
    %v223 = vunpack.c.h.b16 %v141
    %v224 = vunpack.c.l.b16 %v142
    %v225 = vunpack.c.h.b16 %v142
    %v226 = vunpack.c.l.b16 %v143
    %v227 = vunpack.c.h.b16 %v143
    %v228 = vunpack.c.l.b16 %v144
    %v229 = vunpack.c.h.b16 %v144
    %v230 = vunpack.c.l.b16 %v145
    %v231 = vunpack.c.h.b16 %v145
    %v232 = vunpack.c.l.b16 %v146
    %v233 = vunpack.c.h.b16 %v146
    %v234 = vunpack.c.l.b16 %v147
    %v235 = vunpack.c.h.b16 %v147
    %v236 = vunpack.c.l.b16 %v148
    %v237 = vunpack.c.h.b16 %v148
    %v238 = vunpack.c.l.b16 %v149
    %v239 = vunpack.c.h.b16 %v149
    %v240 = vunpack.c.l.b16 %v150
    %v241 = vunpack.c.h.b16 %v150
    %v242 = vunpack.c.l.b16 %v151
    %v243 = vunpack.c.h.b16 %v151
    %v244 = vunpack.c.l.b16 %v152
    %v245 = vunpack.c.h.b16 %v152
    %v246 = vunpack.c.l.b16 %v153
    %v247 = vunpack.c.h.b16 %v153
    %v248 = vunpack.c.l.b16 %v154
    %v249 = vunpack.c.h.b16 %v154
    %v250 = vunpack.c.l.b16 %v155
    %v251 = vunpack.c.h.b16 %v155
    %v252 = vpack.c.b16 %v192, %v188
    %v253 = vpack.c.b16 %v193, %v189
    %v254 = vpack.c.b16 %v194, %v190
    %v255 = vpack.c.b16 %v195, %v191
    %v256 = vpack.c.b16 %v200, %v196
    %v257 = vpack.c.b16 %v201, %v197
    %v258 = vpack.c.b16 %v202, %v198
    %v259 = vpack.c.b16 %v203, %v199
    %v260 = vpack.c.b16 %v208, %v204
    %v261 = vpack.c.b16 %v209, %v205
    %v262 = vpack.c.b16 %v210, %v206
    %v263 = vpack.c.b16 %v211, %v207
    %v264 = vpack.c.b16 %v216, %v212
    %v265 = vpack.c.b16 %v217, %v213
    %v266 = vpack.c.b16 %v218, %v214
    %v267 = vpack.c.b16 %v219, %v215
    %v268 = vpack.c.b16 %v224, %v220
    %v269 = vpack.c.b16 %v225, %v221
    %v270 = vpack.c.b16 %v226, %v222
    %v271 = vpack.c.b16 %v227, %v223
    %v272 = vpack.c.b16 %v232, %v228
    %v273 = vpack.c.b16 %v233, %v229
    %v274 = vpack.c.b16 %v234, %v230
    %v275 = vpack.c.b16 %v235, %v231
    %v276 = vpack.c.b16 %v240, %v236
    %v277 = vpack.c.b16 %v241, %v237
    %v278 = vpack.c.b16 %v242, %v238
    %v279 = vpack.c.b16 %v243, %v239
    %v280 = vpack.c.b16 %v248, %v244
    %v281 = vpack.c.b16 %v249, %v245
    %v282 = vpack.c.b16 %v250, %v246
    %v283 = vpack.c.b16 %v251, %v247
    %316 = vmatprep.subr.bf16.mxu0 %v253
    %317 = vmatpush1.bf16.msra.mxu0 %v252
    %318 = vmatprep.subr.bf16.mxu0 %v257
    %319 = vmatpush1.bf16.msra.mxu0 %v256
    %320 = vmatprep.subr.bf16.mxu0 %v261
    %321 = vmatpush1.bf16.msra.mxu0 %v260
    %322 = vmatprep.subr.bf16.mxu0 %v265
    %323 = vmatpush1.bf16.msra.mxu0 %v264
    %324 = vmatprep.subr.bf16.mxu0 %v269
    %325 = vmatpush1.bf16.msra.mxu0 %v268
    %326 = vmatprep.subr.bf16.mxu0 %v273
    %327 = vmatpush1.bf16.msra.mxu0 %v272
    %328 = vmatprep.subr.bf16.mxu0 %v277
    %329 = vmatpush1.bf16.msra.mxu0 %v276
    %330 = vmatprep.subr.bf16.mxu0 %v281
    %331 = vmatpush1.bf16.msra.mxu0 %v280
    %332 = vmatprep.subr.bf16.mxu0 0
    %333 = vmatpush1.bf16.msra.mxu0 0
    %334 = vmatprep.subr.bf16.mxu0 0
    %335 = vmatpush1.bf16.msra.mxu0 0
    %336 = vmatprep.subr.bf16.mxu0 0
    %337 = vmatpush1.bf16.msra.mxu0 0
    %338 = vmatprep.subr.bf16.mxu0 0
    %339 = vmatpush1.bf16.msra.mxu0 0
    %340 = vmatprep.subr.bf16.mxu0 0
    %341 = vmatpush1.bf16.msra.mxu0 0
    %342 = vmatprep.subr.bf16.mxu0 0
    %343 = vmatpush1.bf16.msra.mxu0 0
    %344 = vmatprep.subr.bf16.mxu0 0
    %345 = vmatpush1.bf16.msra.mxu0 0
    %346 = vmatprep.subr.bf16.mxu0 0
    %347 = vmatpush1.bf16.msra.mxu0 0
    %348 = vmatprep.mubr.bf16.mxu0 0
    %349 = vmatmul.mubr.bf16.gmra.mrb[0].mxu0 %v123
    %v350 = vpop.f32.mrb[0].mxu0
    %v351 = vadd.f32 0.0, %v350
    %v352 = vpop.f32.mrb[0].mxu0
    %v353 = vadd.f32 0.0, %v352
    %v354 = vpop.f32.mrb[0].mxu0
    %v355 = vpop.f32.mrb[0].mxu0
    %356 = vdwg.mxu0
    %357 = vmatprep.subr.bf16.mxu0 %v255
    %358 = vmatpush1.bf16.msra.mxu0 %v254
    %359 = vmatprep.subr.bf16.mxu0 %v259
    %360 = vmatpush1.bf16.msra.mxu0 %v258
    %361 = vmatprep.subr.bf16.mxu0 %v263
    %362 = vmatpush1.bf16.msra.mxu0 %v262
    %363 = vmatprep.subr.bf16.mxu0 %v267
    %364 = vmatpush1.bf16.msra.mxu0 %v266
    %365 = vmatprep.subr.bf16.mxu0 %v271
    %366 = vmatpush1.bf16.msra.mxu0 %v270
    %367 = vmatprep.subr.bf16.mxu0 %v275
    %368 = vmatpush1.bf16.msra.mxu0 %v274
    %369 = vmatprep.subr.bf16.mxu0 %v279
    %370 = vmatpush1.bf16.msra.mxu0 %v278
    %371 = vmatprep.subr.bf16.mxu0 %v283
    %372 = vmatpush1.bf16.msra.mxu0 %v282
    %373 = vmatprep.subr.bf16.mxu0 0
    %374 = vmatpush1.bf16.msra.mxu0 0
    %375 = vmatprep.subr.bf16.mxu0 0
    %376 = vmatpush1.bf16.msra.mxu0 0
    %377 = vmatprep.subr.bf16.mxu0 0
    %378 = vmatpush1.bf16.msra.mxu0 0
    %379 = vmatprep.subr.bf16.mxu0 0
    %380 = vmatpush1.bf16.msra.mxu0 0
    %381 = vmatprep.subr.bf16.mxu0 0
    %382 = vmatpush1.bf16.msra.mxu0 0
    %383 = vmatprep.subr.bf16.mxu0 0
    %384 = vmatpush1.bf16.msra.mxu0 0
    %385 = vmatprep.subr.bf16.mxu0 0
    %386 = vmatpush1.bf16.msra.mxu0 0
    %387 = vmatprep.subr.bf16.mxu0 0
    %388 = vmatpush1.bf16.msra.mxu0 0
    %389 = vmatprep.mubr.bf16.mxu0 0
    %390 = vmatmul.mubr.bf16.gmra.mrb[0].mxu0 %v123
    %v391 = vpop.f32.mrb[0].mxu0
    %v392 = vadd.f32 0.0, %v391
    %v393 = vpop.f32.mrb[0].mxu0
    %v394 = vadd.f32 0.0, %v393
    %v395 = vpop.f32.mrb[0].mxu0
    %v396 = vpop.f32.mrb[0].mxu0
    %397 = vdwg.mxu0
    %v430 = vunpack.c.l.b16 %v91
    %v431 = vunpack.c.h.b16 %v91
    %v432 = vunpack.c.l.b16 %v92
    %v433 = vunpack.c.h.b16 %v92
    %v434 = vunpack.c.l.b16 %v93
    %v435 = vunpack.c.h.b16 %v93
    %v436 = vunpack.c.l.b16 %v94
    %v437 = vunpack.c.h.b16 %v94
    %v438 = vunpack.c.l.b16 %v95
    %v439 = vunpack.c.h.b16 %v95
    %v440 = vunpack.c.l.b16 %v96
    %v441 = vunpack.c.h.b16 %v96
    %v442 = vunpack.c.l.b16 %v97
    %v443 = vunpack.c.h.b16 %v97
    %v444 = vunpack.c.l.b16 %v98
    %v445 = vunpack.c.h.b16 %v98
    %v446 = vunpack.c.l.b16 %v99
    %v447 = vunpack.c.h.b16 %v99
    %v448 = vunpack.c.l.b16 %v100
    %v449 = vunpack.c.h.b16 %v100
    %v450 = vunpack.c.l.b16 %v101
    %v451 = vunpack.c.h.b16 %v101
    %v452 = vunpack.c.l.b16 %v102
    %v453 = vunpack.c.h.b16 %v102
    %v454 = vunpack.c.l.b16 %v103
    %v455 = vunpack.c.h.b16 %v103
    %v456 = vunpack.c.l.b16 %v104
    %v457 = vunpack.c.h.b16 %v104
    %v458 = vunpack.c.l.b16 %v105
    %v459 = vunpack.c.h.b16 %v105
    %v460 = vunpack.c.l.b16 %v106
    %v461 = vunpack.c.h.b16 %v106
    %v462 = vunpack.c.l.b16 %v107
    %v463 = vunpack.c.h.b16 %v107
    %v464 = vunpack.c.l.b16 %v108
    %v465 = vunpack.c.h.b16 %v108
    %v466 = vunpack.c.l.b16 %v109
    %v467 = vunpack.c.h.b16 %v109
    %v468 = vunpack.c.l.b16 %v110
    %v469 = vunpack.c.h.b16 %v110
    %v470 = vunpack.c.l.b16 %v111
    %v471 = vunpack.c.h.b16 %v111
    %v472 = vunpack.c.l.b16 %v112
    %v473 = vunpack.c.h.b16 %v112
    %v474 = vunpack.c.l.b16 %v113
    %v475 = vunpack.c.h.b16 %v113
    %v476 = vunpack.c.l.b16 %v114
    %v477 = vunpack.c.h.b16 %v114
    %v478 = vunpack.c.l.b16 %v115
    %v479 = vunpack.c.h.b16 %v115
    %v480 = vunpack.c.l.b16 %v116
    %v481 = vunpack.c.h.b16 %v116
    %v482 = vunpack.c.l.b16 %v117
    %v483 = vunpack.c.h.b16 %v117
    %v484 = vunpack.c.l.b16 %v118
    %v485 = vunpack.c.h.b16 %v118
    %v486 = vunpack.c.l.b16 %v119
    %v487 = vunpack.c.h.b16 %v119
    %v488 = vunpack.c.l.b16 %v120
    %v489 = vunpack.c.h.b16 %v120
    %v490 = vunpack.c.l.b16 %v121
    %v491 = vunpack.c.h.b16 %v121
    %v492 = vunpack.c.l.b16 %v122
    %v493 = vunpack.c.h.b16 %v122
    %v494 = vpack.c.b16 %v434, %v430
    %v495 = vpack.c.b16 %v435, %v431
    %v496 = vpack.c.b16 %v436, %v432
    %v497 = vpack.c.b16 %v437, %v433
    %v498 = vpack.c.b16 %v442, %v438
    %v499 = vpack.c.b16 %v443, %v439
    %v500 = vpack.c.b16 %v444, %v440
    %v501 = vpack.c.b16 %v445, %v441
    %v502 = vpack.c.b16 %v450, %v446
    %v503 = vpack.c.b16 %v451, %v447
    %v504 = vpack.c.b16 %v452, %v448
    %v505 = vpack.c.b16 %v453, %v449
    %v506 = vpack.c.b16 %v458, %v454
    %v507 = vpack.c.b16 %v459, %v455
    %v508 = vpack.c.b16 %v460, %v456
    %v509 = vpack.c.b16 %v461, %v457
    %v510 = vpack.c.b16 %v466, %v462
    %v511 = vpack.c.b16 %v467, %v463
    %v512 = vpack.c.b16 %v468, %v464
    %v513 = vpack.c.b16 %v469, %v465
    %v514 = vpack.c.b16 %v474, %v470
    %v515 = vpack.c.b16 %v475, %v471
    %v516 = vpack.c.b16 %v476, %v472
    %v517 = vpack.c.b16 %v477, %v473
    %v518 = vpack.c.b16 %v482, %v478
    %v519 = vpack.c.b16 %v483, %v479
    %v520 = vpack.c.b16 %v484, %v480
    %v521 = vpack.c.b16 %v485, %v481
    %v522 = vpack.c.b16 %v490, %v486
    %v523 = vpack.c.b16 %v491, %v487
    %v524 = vpack.c.b16 %v492, %v488
    %v525 = vpack.c.b16 %v493, %v489
    %558 = vmatprep.subr.bf16.mxu0 %v495
    %559 = vmatpush1.bf16.msra.mxu0 %v494
    %560 = vmatprep.subr.bf16.mxu0 %v499
    %561 = vmatpush1.bf16.msra.mxu0 %v498
    %562 = vmatprep.subr.bf16.mxu0 %v503
    %563 = vmatpush1.bf16.msra.mxu0 %v502
    %564 = vmatprep.subr.bf16.mxu0 %v507
    %565 = vmatpush1.bf16.msra.mxu0 %v506
    %566 = vmatprep.subr.bf16.mxu0 %v511
    %567 = vmatpush1.bf16.msra.mxu0 %v510
    %568 = vmatprep.subr.bf16.mxu0 %v515
    %569 = vmatpush1.bf16.msra.mxu0 %v514
    %570 = vmatprep.subr.bf16.mxu0 %v519
    %571 = vmatpush1.bf16.msra.mxu0 %v518
    %572 = vmatprep.subr.bf16.mxu0 %v523
    %573 = vmatpush1.bf16.msra.mxu0 %v522
    %574 = vmatprep.subr.bf16.mxu0 0
    %575 = vmatpush1.bf16.msra.mxu0 0
    %576 = vmatprep.subr.bf16.mxu0 0
    %577 = vmatpush1.bf16.msra.mxu0 0
    %578 = vmatprep.subr.bf16.mxu0 0
    %579 = vmatpush1.bf16.msra.mxu0 0
    %580 = vmatprep.subr.bf16.mxu0 0
    %581 = vmatpush1.bf16.msra.mxu0 0
    %582 = vmatprep.subr.bf16.mxu0 0
    %583 = vmatpush1.bf16.msra.mxu0 0
    %584 = vmatprep.subr.bf16.mxu0 0
    %585 = vmatpush1.bf16.msra.mxu0 0
    %586 = vmatprep.subr.bf16.mxu0 0
    %587 = vmatpush1.bf16.msra.mxu0 0
    %588 = vmatprep.subr.bf16.mxu0 0
    %589 = vmatpush1.bf16.msra.mxu0 0
    %590 = vmatprep.mubr.bf16.mxu0 0
    %591 = vmatmul.mubr.bf16.gmra.mrb[0].mxu0 %v90
    %v592 = vpop.f32.mrb[0].mxu0
    %v593 = vadd.f32 %v351, %v592
    %v594 = vpop.f32.mrb[0].mxu0
    %v595 = vadd.f32 %v353, %v594
    %v596 = vpop.f32.mrb[0].mxu0
    %v597 = vpop.f32.mrb[0].mxu0
    %598 = vdwg.mxu0
    %599 = vmatprep.subr.bf16.mxu0 %v497
    %600 = vmatpush1.bf16.msra.mxu0 %v496
    %601 = vmatprep.subr.bf16.mxu0 %v501
    %602 = vmatpush1.bf16.msra.mxu0 %v500
    %603 = vmatprep.subr.bf16.mxu0 %v505
    %604 = vmatpush1.bf16.msra.mxu0 %v504
    %605 = vmatprep.subr.bf16.mxu0 %v509
    %606 = vmatpush1.bf16.msra.mxu0 %v508
    %607 = vmatprep.subr.bf16.mxu0 %v513
    %608 = vmatpush1.bf16.msra.mxu0 %v512
    %609 = vmatprep.subr.bf16.mxu0 %v517
    %610 = vmatpush1.bf16.msra.mxu0 %v516
    %611 = vmatprep.subr.bf16.mxu0 %v521
    %612 = vmatpush1.bf16.msra.mxu0 %v520
    %613 = vmatprep.subr.bf16.mxu0 %v525
    %614 = vmatpush1.bf16.msra.mxu0 %v524
    %615 = vmatprep.subr.bf16.mxu0 0
    %616 = vmatpush1.bf16.msra.mxu0 0
    %617 = vmatprep.subr.bf16.mxu0 0
    %618 = vmatpush1.bf16.msra.mxu0 0
    %619 = vmatprep.subr.bf16.mxu0 0
    %620 = vmatpush1.bf16.msra.mxu0 0
    %621 = vmatprep.subr.bf16.mxu0 0
    %622 = vmatpush1.bf16.msra.mxu0 0
    %623 = vmatprep.subr.bf16.mxu0 0
    %624 = vmatpush1.bf16.msra.mxu0 0
    %625 = vmatprep.subr.bf16.mxu0 0
    %626 = vmatpush1.bf16.msra.mxu0 0
    %627 = vmatprep.subr.bf16.mxu0 0
    %628 = vmatpush1.bf16.msra.mxu0 0
    %629 = vmatprep.subr.bf16.mxu0 0
    %630 = vmatpush1.bf16.msra.mxu0 0
    %631 = vmatprep.mubr.bf16.mxu0 0
    %632 = vmatmul.mubr.bf16.gmra.mrb[0].mxu0 %v90
    %v633 = vpop.f32.mrb[0].mxu0
    %v634 = vadd.f32 %v392, %v633
    %v635 = vpop.f32.mrb[0].mxu0
    %v636 = vadd.f32 %v394, %v635
    %v637 = vpop.f32.mrb[0].mxu0
    %v638 = vpop.f32.mrb[0].mxu0
    %639 = vdwg.mxu0
    %v640 = vld [vmem:[%s5] sm:$0xf]
    %v642 = vlaneseq
    %v643 = vshrl.u32 %v642, 7
    %v644 = vsub.s32 0, %v643
    %v645 = vrot.slane %v640, %v644
    %v646 = vlaneseq
    %v647 = vshrl.u32 %v646, 7
    %v648 = vsub.s32 1, %v647
    %v649 = vrot.slane %v640, %v648
    %v650 = vlaneseq
    %v651 = vshrl.u32 %v650, 7
    %v652 = vsub.s32 2, %v651
    %v653 = vrot.slane %v640, %v652
    %v654 = vlaneseq
    %v655 = vshrl.u32 %v654, 7
    %v656 = vsub.s32 3, %v655
    %v657 = vrot.slane %v640, %v656
    %v662 = vadd.f32 %v593, %v645
    %v663 = vadd.f32 %v595, %v649
    %v664 = vadd.f32 %v634, %v653
    %v665 = vadd.f32 %v636, %v657
    %v666 = vmul.f32 %v662, 0.5
    %v667 = vtanh.pop %v666
    %v668 = vadd.f32 %v667, 1.0
    %v669 = vmul.f32 %v668, 0.5
    %v670 = vmul.f32 %v663, 0.5
    %v671 = vtanh.pop %v670
    %v672 = vadd.f32 %v671, 1.0
    %v673 = vmul.f32 %v672, 0.5
    %v674 = vtanh.pop %v664
    %v675 = vmul.f32 %v665, 0.5
    %v676 = vtanh.pop %v675
    %v677 = vadd.f32 %v676, 1.0
    %v678 = vmul.f32 %v677, 0.5
    %v679 = vld [vmem:[#allocation7] sm:$0xff]
    %v680 = vmul.f32 %v673, %v679
    %v681 = vmul.f32 %v669, %v674
    %v682 = vadd.f32 %v680, %v681
    %v683 = vtanh.pop %v682
    %v684 = vmul.f32 %v678, %v683
    %685 = vst [vmem:[#allocation11] sm:$0xff] %v684
    %686 = vst [vmem:[#allocation12] sm:$0xff] %v682
    // Predicated region
    $region46: #{tpu_custom_call.1} parent=1 // pred_check
      _
    $region47: #{tpu_custom_call.1} parent=1 // pred_check_branch
      %688 = sbr.rel (0) target = $region49
    $region48: #{tpu_custom_call.1} parent=1 // pred_region
      %s690 = ssub.s32 128, 128
      %691 = vsyncadd [#allocation4], %s690
      %s693 = sshll.u32 [#allocation11], 4
      %s694 = int_to_ptr.vmem [resolvable:$true] %s693
      %696 = dma.vmem_to_hbm [thread:$0]  %s694, 128, %s6, [#allocation4]
    $region49: #{tpu_custom_call.1} parent=1 // pred_fallthru
      _
    // Predicated region
    $region50: #{tpu_custom_call.1} parent=1 // pred_check
      _
    $region51: #{tpu_custom_call.1} parent=1 // pred_check_branch
      %698 = sbr.rel (0) target = $region53
    $region52: #{tpu_custom_call.1} parent=1 // pred_region
      %s700 = ssub.s32 128, 128
      %701 = vsyncadd [#allocation13], %s700
      %s703 = sshll.u32 [#allocation12], 4
      %s704 = int_to_ptr.vmem [resolvable:$true] %s703
      %706 = dma.vmem_to_hbm [thread:$0]  %s704, 128, %s7, [#allocation13]
    $region53: #{tpu_custom_call.1} parent=1 // pred_fallthru
      _
    // Predicated region
    $region54: #{tpu_custom_call.1} parent=1 // pred_check
      _
    $region55: #{tpu_custom_call.1} parent=1 // pred_check_branch
      %708 = sbr.rel (0) target = $region57
    $region56: #{tpu_custom_call.1} parent=1 // pred_region
      %709 = dma.done [#allocation4], 128
    $region57: #{tpu_custom_call.1} parent=1 // pred_fallthru
      _
    // Predicated region
    $region58: #{tpu_custom_call.1} parent=1 // pred_check
      _
    $region59: #{tpu_custom_call.1} parent=1 // pred_check_branch
      %711 = sbr.rel (0) target = $region61
    $region60: #{tpu_custom_call.1} parent=1 // pred_region
      %712 = dma.done [#allocation13], 128
    $region61: #{tpu_custom_call.1} parent=1 // pred_fallthru
      _
    %713 = vsyncpa [#allocation3], 1
    %714 = vsyncpa [#allocation6], 1
    %715 = vsyncpa [#allocation9], 1
    %716 = vsyncpa [#allocation4], 1
    %717 = vsyncpa [#allocation13], 1

</llo_original>
